<compile_context>
chip_gen: v5e
topology: v5e:2x2
jax: 0.10.0
libtpu: 0.0.40
codegen_flags: <defaults>
</compile_context>

<pallas_src>
import functools

import jax
import jax.numpy as jnp
from jax import lax
from jax.experimental import pallas as pl
from jax.experimental.pallas import tpu as pltpu

NEG_SLOPE = 0.01   # nn.LeakyReLU default
BN_EPS = 1e-5      # nn.BatchNorm1d default

H1_RAW, H2_RAW = 500, 300
H1, H2 = 512, 384                      # lane-padded hidden sizes

MAX_TB = 1024                          # batch-tile cap (footprint is only a few MiB)


def _round_up(n, m):
    return (n + m - 1) // m * m


def _choose_tiling(B):
    """Pick (TB, B_pad, n_tiles) so that:
       * total batch padding stays small (<= 8 rows per tile), no round_up(B, TB) blow-up,
       * the grid has >= 2 steps whenever B >= 16 (keeps both v7x TensorCores busy),
       * TB <= MAX_TB (amortizes ~0.35 us per-step overhead; VMEM is nowhere near binding).
    """
    B8 = _round_up(B, 8)
    n_tiles = max(1, pl.cdiv(B8, MAX_TB))
    if B8 >= 16:
        n_tiles = max(n_tiles, 2)
    TB = _round_up(pl.cdiv(B8, n_tiles), 8)
    B_pad = TB * n_tiles
    return TB, B_pad, n_tiles


def _default_bf16_epilogue():
    """bf16 VPU exists on v6e/v7x; keep the f32 epilogue on older chips (v2-v5)."""
    try:
        kind = jax.devices()[0].device_kind.lower()
    except Exception:
        return True
    return not any(t in kind for t in ("v2", "v3", "v4", "v5"))


def _make_resident_spec(shape, index_map):
    """Weights/biases: same block every grid step -> VMEM resident, single buffer."""
    try:
        return pl.BlockSpec(shape, index_map, pipeline_mode=pl.Buffered(1))
    except TypeError:   # older jax without pipeline_mode on BlockSpec
        return pl.BlockSpec(shape, index_map)


# ----------------------------------------------------------------------------- kernel
def _encoder_kernel(x_ref, w1_ref, b1_ref, w2_ref, b2_ref, w3_ref, b3_ref, o_ref,
                    *, bf16_epilogue):
    def leaky_to_bf16(h32):
        if bf16_epilogue:
            # v6e/v7x: bf16 VALU -> half the cmp/mul/select vreg passes.
            hb = h32.astype(jnp.bfloat16)
            return jnp.where(hb >= 0, hb, NEG_SLOPE * hb)
        # v5e and older: no bf16 VALU, keep the activation in f32, cast after.
        h32 = jnp.where(h32 >= 0, h32, NEG_SLOPE * h32)
        return h32.astype(jnp.bfloat16)

    # layer1: Linear (BN pre-folded) + LeakyReLU  (Dropout = identity in eval mode)
    x = x_ref[...].astype(jnp.bfloat16)
    h = jnp.dot(x, w1_ref[...], preferred_element_type=jnp.float32) + b1_ref[...]
    h = leaky_to_bf16(h)

    # layer2: Linear (BN pre-folded) + LeakyReLU
    h = jnp.dot(h, w2_ref[...], preferred_element_type=jnp.float32) + b2_ref[...]
    h = leaky_to_bf16(h)

    # output: Linear
    out = jnp.dot(h, w3_ref[...], preferred_element_type=jnp.float32) + b3_ref[...]
    o_ref[...] = out.astype(o_ref.dtype)


# ----------------------------------------------------------------------------- wrapper
@functools.partial(jax.jit, static_argnames=("latent_dim", "bf16_epilogue"))
def encoder_forward(x, prepared, latent_dim, bf16_epilogue=True):
    """x: (B, input_dim) float32. prepared: dict from prepare_params()."""
    B, in_dim = x.shape
    latent_pad = prepared["w3"].shape[1]

    TB, B_pad, n_tiles = _choose_tiling(B)
    if B_pad != B:
        x = jnp.pad(x, ((0, B_pad - B), (0, 0)))

    const = lambda i: (0, 0)

    out = pl.pallas_call(
        functools.partial(_encoder_kernel, bf16_epilogue=bf16_epilogue),
        out_shape=jax.ShapeDtypeStruct((B_pad, latent_pad), jnp.float32),
        grid=(n_tiles,),
        in_specs=[
            pl.BlockSpec((TB, in_dim), lambda i: (i, 0)),              # x tile (pipelined)
            _make_resident_spec((in_dim, H1), const),                  # w1 (bf16, resident)
            _make_resident_spec((1, H1), const),                       # b1 (BN folded, f32)
            _make_resident_spec((H1, H2), const),                      # w2
            _make_resident_spec((1, H2), const),                       # b2
            _make_resident_spec((H2, latent_pad), const),              # w3
            _make_resident_spec((1, latent_pad), const),               # b3
        ],
        out_specs=pl.BlockSpec((TB, latent_pad), lambda i: (i, 0)),
        compiler_params=pltpu.CompilerParams(
            dimension_semantics=("parallel",),
            vmem_limit_bytes=32 * 1024 * 1024,   # raises v5e's 16 MiB default; default elsewhere
        ),
    )(
        x,
        prepared["w1"], prepared["b1"],
        prepared["w2"], prepared["b2"],
        prepared["w3"], prepared["b3"],
    )
    return out[:B, :latent_dim]


# ----------------------------------------------------------------------------- params
def init_params(key, input_dim, latent_dim):
    """Raw parameters matching nn.Linear / nn.BatchNorm1d shapes (deterministic)."""
    ks = jax.random.split(key, 8)

    def linear(kw, kb, fan_in, fan_out):
        bound = 1.0 / jnp.sqrt(fan_in)
        w = jax.random.uniform(kw, (fan_in, fan_out), jnp.float32, -bound, bound)
        b = jax.random.uniform(kb, (1, fan_out), jnp.float32, -bound, bound)
        return w, b

    w1, b1 = linear(ks[0], ks[1], input_dim, H1_RAW)
    w2, b2 = linear(ks[2], ks[3], H1_RAW, H2_RAW)
    w3, b3 = linear(ks[4], ks[5], H2_RAW, latent_dim)

    g1 = 1.0 + 0.1 * jax.random.normal(ks[6], (1, H1_RAW), jnp.float32)
    be1 = 0.05 * jax.random.normal(ks[7], (1, H1_RAW), jnp.float32)
    m1 = jnp.zeros((1, H1_RAW), jnp.float32)
    v1 = jnp.ones((1, H1_RAW), jnp.float32)

    g2 = jnp.ones((1, H2_RAW), jnp.float32)
    be2 = jnp.zeros((1, H2_RAW), jnp.float32)
    m2 = jnp.zeros((1, H2_RAW), jnp.float32)
    v2 = jnp.ones((1, H2_RAW), jnp.float32)

    return dict(
        w1=w1, b1=b1, g1=g1, be1=be1, m1=m1, v1=v1,
        w2=w2, b2=b2, g2=g2, be2=be2, m2=m2, v2=v2,
        w3=w3, b3=b3,
    )


def prepare_params(p, latent_dim):
    """One-time inference prep: fold eval-mode BN into the Linears, zero-pad feature
    dims to lane multiples, cast weights to bf16 (biases stay f32)."""
    latent_pad = _round_up(max(latent_dim, 128), 128)
    in_dim = p["w1"].shape[0]

    # Fold BN1 into Linear1
    s1 = p["g1"] * lax.rsqrt(p["v1"] + BN_EPS)          # (1, 500)
    w1 = p["w1"] * s1
    b1 = (p["b1"] - p["m1"]) * s1 + p["be1"]
    # Fold BN2 into Linear2
    s2 = p["g2"] * lax.rsqrt(p["v2"] + BN_EPS)          # (1, 300)
    w2 = p["w2"] * s2
    b2 = (p["b2"] - p["m2"]) * s2 + p["be2"]

    def pad2(a, rows, cols):
        out = jnp.zeros((rows, cols), jnp.float32)
        return out.at[: a.shape[0], : a.shape[1]].set(a)

    w1p = pad2(w1, in_dim, H1).astype(jnp.bfloat16)
    b1p = pad2(b1, 1, H1)
    w2p = pad2(w2, H1, H2).astype(jnp.bfloat16)
    b2p = pad2(b2, 1, H2)
    w3p = pad2(p["w3"], H2, latent_pad).astype(jnp.bfloat16)
    b3p = pad2(p["b3"], 1, latent_pad)

    return dict(w1=w1p, b1=b1p, w2=w2p, b2=b2p, w3=w3p, b3=b3p)


# ----------------------------------------------------------------------------- refs
def _reference_f32(x, p):
    """Original-semantics eval-mode forward in pure f32 (unfolded BN)."""
    h = x @ p["w1"] + p["b1"]
    h = (h - p["m1"]) * lax.rsqrt(p["v1"] + BN_EPS) * p["g1"] + p["be1"]
    h = jnp.where(h >= 0, h, NEG_SLOPE * h)
    h = h @ p["w2"] + p["b2"]
    h = (h - p["m2"]) * lax.rsqrt(p["v2"] + BN_EPS) * p["g2"] + p["be2"]
    h = jnp.where(h >= 0, h, NEG_SLOPE * h)
    return h @ p["w3"] + p["b3"]


def _reference_prepared(x, q, latent_dim, bf16_epilogue):
    """Reference using the same folded/padded/bf16-rounded params & epilogue dtype."""
    f32 = jnp.float32

    def leaky(h):
        if bf16_epilogue:
            hb = h.astype(jnp.bfloat16)
            return jnp.where(hb >= 0, hb, NEG_SLOPE * hb).astype(f32)
        return jnp.where(h >= 0, h, NEG_SLOPE * h)

    h = x.astype(jnp.bfloat16).astype(f32) @ q["w1"].astype(f32) + q["b1"]
    h = leaky(h)
    h = h.astype(jnp.bfloat16).astype(f32) @ q["w2"].astype(f32) + q["b2"]
    h = leaky(h)
    o = h.astype(jnp.bfloat16).astype(f32) @ q["w3"].astype(f32) + q["b3"]
    return o[:, :latent_dim]


# ----------------------------------------------------------------------------- main
if __name__ == "__main__":
    key = jax.random.PRNGKey(0)
    k_x, k_p = jax.random.split(key)

    batch, input_dim, latent_dim = 8, 32, 16
    x = jax.random.normal(k_x, (batch, input_dim), jnp.float32)
    raw = init_params(k_p, input_dim, latent_dim)
    prepared = prepare_params(raw, latent_dim)

    bf16_epi = _default_bf16_epilogue()

    out = encoder_forward(x, prepared, latent_dim, bf16_epilogue=bf16_epi)
    jax.block_until_ready(out)
    assert out.shape == (batch, latent_dim)

    # Strict check against a reference using identical (folded + bf16-rounded) params.
    ref_strict = _reference_prepared(x, prepared, latent_dim, bf16_epi)
    assert jnp.allclose(out, ref_strict, atol=1e-3, rtol=1e-3), "mismatch vs prepared ref"

    # Looser check against the original f32, un-folded eval-mode semantics
    # (bf16 matmul inputs introduce ~1e-3-level relative error).
    ref_f32 = _reference_f32(x, raw)
    assert jnp.allclose(out, ref_f32, atol=3e-2, rtol=3e-2), "mismatch vs f32 semantics"

    # Exercise an awkward batch size: multi-step grid + minimal batch padding path.
    batch2 = 520
    x2 = jax.random.normal(jax.random.PRNGKey(1), (batch2, input_dim), jnp.float32)
    out2 = encoder_forward(x2, prepared, latent_dim, bf16_epilogue=bf16_epi)
    jax.block_until_ready(out2)
    assert out2.shape == (batch2, latent_dim)
    ref2 = _reference_prepared(x2, prepared, latent_dim, bf16_epi)
    assert jnp.allclose(out2, ref2, atol=1e-3, rtol=1e-3), "mismatch on padded multi-tile batch"

    print("KERNEL_OK")
</pallas_src>

<mosaic_0001>
module attributes {stable_mosaic.version = 11 : i64} {
  func.func @_encoder_kernel(%arg0: i32, %arg1: memref<8x32xf32, #tpu.memory_space<vmem>>, %arg2: memref<32x512xbf16, #tpu.memory_space<vmem>>, %arg3: memref<1x512xf32, #tpu.memory_space<vmem>>, %arg4: memref<512x384xbf16, #tpu.memory_space<vmem>>, %arg5: memref<1x384xf32, #tpu.memory_space<vmem>>, %arg6: memref<384x128xbf16, #tpu.memory_space<vmem>>, %arg7: memref<1x128xf32, #tpu.memory_space<vmem>>, %arg8: memref<8x128xf32, #tpu.memory_space<vmem>>) attributes {dimension_semantics = [#tpu.dimension_semantics<parallel>], iteration_bounds = array<i64: 1>, scalar_prefetch = 0 : i64, scratch_operands = 0 : i64, tpu.core_type = #tpu.core_type<tc>, window_params = [{transform_indices = @transform_0, window_bounds = array<i64: 8, 32>}, {pipeline_mode = #tpu.pipeline_mode<synchronous>, transform_indices = @transform_1, window_bounds = array<i64: 32, 512>}, {pipeline_mode = #tpu.pipeline_mode<synchronous>, transform_indices = @transform_2, window_bounds = array<i64: 1, 512>}, {pipeline_mode = #tpu.pipeline_mode<synchronous>, transform_indices = @transform_3, window_bounds = array<i64: 512, 384>}, {pipeline_mode = #tpu.pipeline_mode<synchronous>, transform_indices = @transform_4, window_bounds = array<i64: 1, 384>}, {pipeline_mode = #tpu.pipeline_mode<synchronous>, transform_indices = @transform_5, window_bounds = array<i64: 384, 128>}, {pipeline_mode = #tpu.pipeline_mode<synchronous>, transform_indices = @transform_6, window_bounds = array<i64: 1, 128>}, {transform_indices = @transform_7, window_bounds = array<i64: 8, 128>}]} {
    %c0 = arith.constant 0 : index
    %c0_0 = arith.constant 0 : index
    %0 = vector.load %arg1[%c0, %c0_0] : memref<8x32xf32, #tpu.memory_space<vmem>>, vector<8x32xf32>
    %1 = arith.truncf %0 : vector<8x32xf32> to vector<8x32xbf16>
    %c0_1 = arith.constant 0 : index
    %c0_2 = arith.constant 0 : index
    %2 = vector.load %arg2[%c0_1, %c0_2] : memref<32x512xbf16, #tpu.memory_space<vmem>>, vector<32x512xbf16>
    %cst = arith.constant dense<0.000000e+00> : vector<8x512xf32>
    %3 = tpu.matmul %1, %2, %cst {dimension_numbers = #tpu.dot_dimension_numbers<[1], [0], [0], [1], [0, 0, 1, 1], [], []>} : vector<8x32xbf16>, vector<32x512xbf16>, vector<8x512xf32> -> vector<8x512xf32>
    %c0_3 = arith.constant 0 : index
    %c0_4 = arith.constant 0 : index
    %4 = vector.load %arg3[%c0_3, %c0_4] : memref<1x512xf32, #tpu.memory_space<vmem>>, vector<1x512xf32>
    %5 = vector.broadcast %4 : vector<1x512xf32> to vector<8x512xf32>
    %6 = arith.addf %3, %5 : vector<8x512xf32>
    %7 = arith.truncf %6 : vector<8x512xf32> to vector<8x512xbf16>
    %cst_5 = arith.constant 0.000000e+00 : bf16
    %8 = vector.broadcast %cst_5 : bf16 to vector<8x512xbf16>
    %9 = arith.cmpf oge, %7, %8 : vector<8x512xbf16>
    %cst_6 = arith.constant 1.000980e-02 : bf16
    %10 = vector.broadcast %cst_6 : bf16 to vector<8x512xbf16>
    %11 = arith.mulf %10, %7 : vector<8x512xbf16>
    %12 = arith.select %9, %7, %11 : vector<8x512xi1>, vector<8x512xbf16>
    %c0_7 = arith.constant 0 : index
    %c0_8 = arith.constant 0 : index
    %13 = vector.load %arg4[%c0_7, %c0_8] : memref<512x384xbf16, #tpu.memory_space<vmem>>, vector<512x384xbf16>
    %cst_9 = arith.constant dense<0.000000e+00> : vector<8x384xf32>
    %14 = tpu.matmul %12, %13, %cst_9 {dimension_numbers = #tpu.dot_dimension_numbers<[1], [0], [0], [1], [0, 0, 1, 1], [], []>} : vector<8x512xbf16>, vector<512x384xbf16>, vector<8x384xf32> -> vector<8x384xf32>
    %c0_10 = arith.constant 0 : index
    %c0_11 = arith.constant 0 : index
    %15 = vector.load %arg5[%c0_10, %c0_11] : memref<1x384xf32, #tpu.memory_space<vmem>>, vector<1x384xf32>
    %16 = vector.broadcast %15 : vector<1x384xf32> to vector<8x384xf32>
    %17 = arith.addf %14, %16 : vector<8x384xf32>
    %18 = arith.truncf %17 : vector<8x384xf32> to vector<8x384xbf16>
    %cst_12 = arith.constant 0.000000e+00 : bf16
    %19 = vector.broadcast %cst_12 : bf16 to vector<8x384xbf16>
    %20 = arith.cmpf oge, %18, %19 : vector<8x384xbf16>
    %cst_13 = arith.constant 1.000980e-02 : bf16
    %21 = vector.broadcast %cst_13 : bf16 to vector<8x384xbf16>
    %22 = arith.mulf %21, %18 : vector<8x384xbf16>
    %23 = arith.select %20, %18, %22 : vector<8x384xi1>, vector<8x384xbf16>
    %c0_14 = arith.constant 0 : index
    %c0_15 = arith.constant 0 : index
    %24 = vector.load %arg6[%c0_14, %c0_15] : memref<384x128xbf16, #tpu.memory_space<vmem>>, vector<384x128xbf16>
    %cst_16 = arith.constant dense<0.000000e+00> : vector<8x128xf32>
    %25 = tpu.matmul %23, %24, %cst_16 {dimension_numbers = #tpu.dot_dimension_numbers<[1], [0], [0], [1], [0, 0, 1, 1], [], []>} : vector<8x384xbf16>, vector<384x128xbf16>, vector<8x128xf32> -> vector<8x128xf32>
    %c0_17 = arith.constant 0 : index
    %c0_18 = arith.constant 0 : index
    %26 = vector.load %arg7[%c0_17, %c0_18] : memref<1x128xf32, #tpu.memory_space<vmem>>, vector<1x128xf32>
    %27 = vector.broadcast %26 : vector<1x128xf32> to vector<8x128xf32>
    %28 = arith.addf %25, %27 : vector<8x128xf32>
    %c0_19 = arith.constant 0 : index
    %c0_20 = arith.constant 0 : index
    %29 = vector.load %arg8[%c0_19, %c0_20] : memref<8x128xf32, #tpu.memory_space<vmem>>, vector<8x128xf32>
    tpu.vector_store %arg8[%c0_19, %c0_20], %28 {strides = array<i32>} : memref<8x128xf32, #tpu.memory_space<vmem>>, vector<8x128xf32>,
    return
  }
  func.func @transform_0(%arg0: i32) -> (i32, i32) {
    %c0_i32 = arith.constant 0 : i32
    %c0_i32_0 = arith.constant 0 : i32
    return %arg0, %c0_i32 : i32, i32
  }
  func.func @transform_1(%arg0: i32) -> (i32, i32) {
    %c0_i32 = arith.constant 0 : i32
    %c0_i32_0 = arith.constant 0 : i32
    %c0_i32_1 = arith.constant 0 : i32
    return %c0_i32, %c0_i32_0 : i32, i32
  }
  func.func @transform_2(%arg0: i32) -> (i32, i32) {
    %c0_i32 = arith.constant 0 : i32
    %c0_i32_0 = arith.constant 0 : i32
    %c0_i32_1 = arith.constant 0 : i32
    return %c0_i32, %c0_i32_0 : i32, i32
  }
  func.func @transform_3(%arg0: i32) -> (i32, i32) {
    %c0_i32 = arith.constant 0 : i32
    %c0_i32_0 = arith.constant 0 : i32
    %c0_i32_1 = arith.constant 0 : i32
    return %c0_i32, %c0_i32_0 : i32, i32
  }
  func.func @transform_4(%arg0: i32) -> (i32, i32) {
    %c0_i32 = arith.constant 0 : i32
    %c0_i32_0 = arith.constant 0 : i32
    %c0_i32_1 = arith.constant 0 : i32
    return %c0_i32, %c0_i32_0 : i32, i32
  }
  func.func @transform_5(%arg0: i32) -> (i32, i32) {
    %c0_i32 = arith.constant 0 : i32
    %c0_i32_0 = arith.constant 0 : i32
    %c0_i32_1 = arith.constant 0 : i32
    return %c0_i32, %c0_i32_0 : i32, i32
  }
  func.func @transform_6(%arg0: i32) -> (i32, i32) {
    %c0_i32 = arith.constant 0 : i32
    %c0_i32_0 = arith.constant 0 : i32
    %c0_i32_1 = arith.constant 0 : i32
    return %c0_i32, %c0_i32_0 : i32, i32
  }
  func.func @transform_7(%arg0: i32) -> (i32, i32) {
    %c0_i32 = arith.constant 0 : i32
    %c0_i32_0 = arith.constant 0 : i32
    return %arg0, %c0_i32 : i32, i32
  }
}

</mosaic_0001>

<llo_original>
// kernel: encoder_forward.1
$region0: #{encoder_forward.1}
  #allocation0 [shape = 'u32[]', space=smem, size = 0x4, offset = 0x4, fixed_abs, tag = 'smem constant byte address 0x4 - core index']
  #allocation1 [shape = 'u32[72,128]{1,0:T(1,128)}', space=vmem, size = 0x9000, scoped, tag = 'internal scratch']
  %s0 = inlined_call_operand.hbm [shape: f32[8,32], index: 0, kind: input, shape index: {}]
  %s1 = inlined_call_operand.hbm [shape: bf16[32,512], index: 1, kind: input, shape index: {}]
  %s2 = inlined_call_operand.hbm [shape: f32[1,512], index: 2, kind: input, shape index: {}]
  %s3 = inlined_call_operand.hbm [shape: bf16[512,384], index: 3, kind: input, shape index: {}]
  %s4 = inlined_call_operand.hbm [shape: f32[1,384], index: 4, kind: input, shape index: {}]
  %s5 = inlined_call_operand.hbm [shape: bf16[384,128], index: 5, kind: input, shape index: {}]
  %s6 = inlined_call_operand.vmem [shape: f32[1,128], index: 6, kind: input, shape index: {}]
  %s7 = inlined_call_operand.hbm [shape: f32[8,128], index: 7, kind: output, shape index: {}]
  %s8 = sld [smem:[#allocation0]]
  $region62: #{encoder_forward.1} parent=0
    _
  %s10 = ssub.s32 1, %s8
  %s11 = scalar_select 0, %s10, %s8
  $region1: #{encoder_forward.1} parent=0
    #allocation2 [shape = 'u8[4096]{0}', space=vmem, size = 0x1000, scoped, tag = 'input window, operand 0, single buffered']
    #allocation3 [shape = 's32[1]{0}', space=sflag, size = 0x4, scoped, tag = 'scoped memory for encoder_forward.1']
    #allocation4 [shape = 's32[1]{0}', space=sflag, size = 0x4, scoped, tag = 'scoped memory for encoder_forward.1']
    #allocation5 [shape = 'u8[32768]{0}', space=vmem, size = 0x8000, scoped, tag = 'input window, operand 1, single buffered']
    #allocation6 [shape = 's32[1]{0}', space=sflag, size = 0x4, scoped, tag = 'scoped memory for encoder_forward.1']
    #allocation7 [shape = 'u8[2048]{0}', space=vmem, size = 0x800, scoped, tag = 'input window, operand 2, single buffered']
    #allocation8 [shape = 'u8[393216]{0}', space=vmem, size = 0x60000, scoped, tag = 'input window, operand 3, single buffered']
    #allocation9 [shape = 's32[1]{0}', space=sflag, size = 0x4, scoped, tag = 'scoped memory for encoder_forward.1']
    #allocation10 [shape = 'u8[1536]{0}', space=vmem, size = 0x800, scoped, tag = 'input window, operand 4, single buffered']
    #allocation11 [shape = 'u8[98304]{0}', space=vmem, size = 0x18000, scoped, tag = 'input window, operand 5, single buffered']
    #allocation12 [shape = 's32[1]{0}', space=sflag, size = 0x4, scoped, tag = 'scoped memory for encoder_forward.1']
    #allocation13 [shape = 'u8[4096]{0}', space=vmem, size = 0x1000, scoped, tag = 'output window, operand 0, single buffered']
    %12 = vsyncpa [#allocation3], 0
    %13 = vsyncpa [#allocation6], 0
    %14 = vsyncpa [#allocation9], 0
    %15 = vsyncpa [#allocation12], 0
    %16 = vsyncpa [#allocation4], 0
    // Predicated region
    $region2: #{encoder_forward.1} parent=1 // pred_check
      _
    $region3: #{encoder_forward.1} parent=1 // pred_check_branch
      %18 = sbr.rel (0) target = $region5
    $region4: #{encoder_forward.1} parent=1 // pred_region
      %20 = vsyncadd [#allocation3], 0
      %s22 = sshll.u32 %s0, 4
      %s23 = int_to_ptr.hbm [resolvable:$true] %s22
      %s24 = sshll.u32 [#allocation2], 4
      %s25 = int_to_ptr.vmem [resolvable:$true] %s24
      %27 = dma.hbm_to_vmem [thread:$0]  %s23, 128, %s25, [#allocation3]
    $region5: #{encoder_forward.1} parent=1 // pred_fallthru
      _
    // Predicated region
    $region6: #{encoder_forward.1} parent=1 // pred_check
      _
    $region7: #{encoder_forward.1} parent=1 // pred_check_branch
      %29 = sbr.rel (0) target = $region9
    $region8: #{encoder_forward.1} parent=1 // pred_region
      %31 = vsyncadd [#allocation6], 0
      %s32 = sshll.u32 %s1, 4
      %s33 = int_to_ptr.hbm [resolvable:$true] %s32
      %s34 = sshll.u32 [#allocation5], 4
      %s35 = int_to_ptr.vmem [resolvable:$true] %s34
      %40 = dma.hbm_to_vmem [thread:$0]  %s33, 1024, %s35, [#allocation6], 256, 256, 16
    $region9: #{encoder_forward.1} parent=1 // pred_fallthru
      _
    // Predicated region
    $region10: #{encoder_forward.1} parent=1 // pred_check
      _
    $region11: #{encoder_forward.1} parent=1 // pred_check_branch
      %42 = sbr.rel (0) target = $region13
    $region12: #{encoder_forward.1} parent=1 // pred_region
      %44 = vsyncadd [#allocation6], 0
      %s46 = sshll.u32 %s2, 4
      %s47 = int_to_ptr.hbm [resolvable:$true] %s46
      %s48 = sshll.u32 [#allocation7], 4
      %s49 = int_to_ptr.vmem [resolvable:$true] %s48
      %51 = dma.hbm_to_vmem [thread:$0]  %s47, 64, %s49, [#allocation6]
    $region13: #{encoder_forward.1} parent=1 // pred_fallthru
      _
    // Predicated region
    $region14: #{encoder_forward.1} parent=1 // pred_check
      _
    $region15: #{encoder_forward.1} parent=1 // pred_check_branch
      %53 = sbr.rel (0) target = $region17
    $region16: #{encoder_forward.1} parent=1 // pred_region
      %55 = vsyncadd [#allocation9], 0
      %s56 = sshll.u32 %s3, 4
      %s57 = int_to_ptr.hbm [resolvable:$true] %s56
      %s58 = sshll.u32 [#allocation8], 4
      %s59 = int_to_ptr.vmem [resolvable:$true] %s58
      %64 = dma.hbm_to_vmem [thread:$0]  %s57, 12288, %s59, [#allocation9], 192, 192, 12
    $region17: #{encoder_forward.1} parent=1 // pred_fallthru
      _
    // Predicated region
    $region18: #{encoder_forward.1} parent=1 // pred_check
      _
    $region19: #{encoder_forward.1} parent=1 // pred_check_branch
      %66 = sbr.rel (0) target = $region21
    $region20: #{encoder_forward.1} parent=1 // pred_region
      %68 = vsyncadd [#allocation9], 0
      %s70 = sshll.u32 %s4, 4
      %s71 = int_to_ptr.hbm [resolvable:$true] %s70
      %s72 = sshll.u32 [#allocation10], 4
      %s73 = int_to_ptr.vmem [resolvable:$true] %s72
      %75 = dma.hbm_to_vmem [thread:$0]  %s71, 48, %s73, [#allocation9]
    $region21: #{encoder_forward.1} parent=1 // pred_fallthru
      _
    // Predicated region
    $region22: #{encoder_forward.1} parent=1 // pred_check
      _
    $region23: #{encoder_forward.1} parent=1 // pred_check_branch
      %77 = sbr.rel (0) target = $region25
    $region24: #{encoder_forward.1} parent=1 // pred_region
      %79 = vsyncadd [#allocation12], 0
      %s80 = sshll.u32 %s5, 4
      %s81 = int_to_ptr.hbm [resolvable:$true] %s80
      %s82 = sshll.u32 [#allocation11], 4
      %s83 = int_to_ptr.vmem [resolvable:$true] %s82
      %88 = dma.hbm_to_vmem [thread:$0]  %s81, 3072, %s83, [#allocation12], 64, 64, 4
    $region25: #{encoder_forward.1} parent=1 // pred_fallthru
      _
    // Predicated region
    $region26: #{encoder_forward.1} parent=1 // pred_check
      _
    $region27: #{encoder_forward.1} parent=1 // pred_check_branch
      %90 = sbr.rel (0) target = $region29
    $region28: #{encoder_forward.1} parent=1 // pred_region
      _
    $region29: #{encoder_forward.1} parent=1 // pred_fallthru
      _
    // Predicated region
    $region30: #{encoder_forward.1} parent=1 // pred_check
      _
    $region31: #{encoder_forward.1} parent=1 // pred_check_branch
      %92 = sbr.rel (0) target = $region33
    $region32: #{encoder_forward.1} parent=1 // pred_region
      %94 = dma.done [#allocation3], 128
    $region33: #{encoder_forward.1} parent=1 // pred_fallthru
      _
    // Predicated region
    $region34: #{encoder_forward.1} parent=1 // pred_check
      _
    $region35: #{encoder_forward.1} parent=1 // pred_check_branch
      %96 = sbr.rel (0) target = $region37
    $region36: #{encoder_forward.1} parent=1 // pred_region
      %98 = dma.done [#allocation6], 1024
    $region37: #{encoder_forward.1} parent=1 // pred_fallthru
      _
    // Predicated region
    $region38: #{encoder_forward.1} parent=1 // pred_check
      _
    $region39: #{encoder_forward.1} parent=1 // pred_check_branch
      %100 = sbr.rel (0) target = $region41
    $region40: #{encoder_forward.1} parent=1 // pred_region
      %102 = dma.done [#allocation6], 64
    $region41: #{encoder_forward.1} parent=1 // pred_fallthru
      _
    // Predicated region
    $region42: #{encoder_forward.1} parent=1 // pred_check
      _
    $region43: #{encoder_forward.1} parent=1 // pred_check_branch
      %104 = sbr.rel (0) target = $region45
    $region44: #{encoder_forward.1} parent=1 // pred_region
      %106 = dma.done [#allocation9], 12288
    $region45: #{encoder_forward.1} parent=1 // pred_fallthru
      _
    // Predicated region
    $region46: #{encoder_forward.1} parent=1 // pred_check
      _
    $region47: #{encoder_forward.1} parent=1 // pred_check_branch
      %108 = sbr.rel (0) target = $region49
    $region48: #{encoder_forward.1} parent=1 // pred_region
      %110 = dma.done [#allocation9], 48
    $region49: #{encoder_forward.1} parent=1 // pred_fallthru
      _
    // Predicated region
    $region50: #{encoder_forward.1} parent=1 // pred_check
      _
    $region51: #{encoder_forward.1} parent=1 // pred_check_branch
      %112 = sbr.rel (0) target = $region53
    $region52: #{encoder_forward.1} parent=1 // pred_region
      %114 = dma.done [#allocation12], 3072
    $region53: #{encoder_forward.1} parent=1 // pred_fallthru
      _
    %v116 = vld [vmem:[#allocation2] sm:$0xff]
    %v117 = vpack.c.bf16 %v116, %v116
    %v118 = vld [vmem:[#allocation5] sm:$0xff]
    %v119 = vld [vmem:[#allocation5 + $0x8] sm:$0xff]
    %v120 = vld [vmem:[#allocation5 + $0x10] sm:$0xff]
    %v121 = vld [vmem:[#allocation5 + $0x18] sm:$0xff]
    %v122 = vld [vmem:[#allocation5 + $0x20] sm:$0xff]
    %v123 = vld [vmem:[#allocation5 + $0x28] sm:$0xff]
    %v124 = vld [vmem:[#allocation5 + $0x30] sm:$0xff]
    %v125 = vld [vmem:[#allocation5 + $0x38] sm:$0xff]
    %v126 = vld [vmem:[#allocation7] sm:$0xf]
    %v128 = vperm.slane %v126, 0
    %v129 = vperm.slane %v126, 1
    %v130 = vperm.slane %v126, 2
    %v131 = vperm.slane %v126, 3
    %v144 = vunpack.c.l.b16 %v118
    %v145 = vunpack.c.h.b16 %v118
    %v146 = vunpack.c.l.b16 %v119
    %v147 = vunpack.c.h.b16 %v119
    %v148 = vunpack.c.l.b16 %v120
    %v149 = vunpack.c.h.b16 %v120
    %v150 = vunpack.c.l.b16 %v121
    %v151 = vunpack.c.h.b16 %v121
    %v152 = vunpack.c.l.b16 %v122
    %v153 = vunpack.c.h.b16 %v122
    %v154 = vunpack.c.l.b16 %v123
    %v155 = vunpack.c.h.b16 %v123
    %v156 = vunpack.c.l.b16 %v124
    %v157 = vunpack.c.h.b16 %v124
    %v158 = vunpack.c.l.b16 %v125
    %v159 = vunpack.c.h.b16 %v125
    %v160 = vpack.c.b16 %v148, %v144
    %v161 = vpack.c.b16 %v149, %v145
    %v162 = vpack.c.b16 %v150, %v146
    %v163 = vpack.c.b16 %v151, %v147
    %v164 = vpack.c.b16 %v156, %v152
    %v165 = vpack.c.b16 %v157, %v153
    %v166 = vpack.c.b16 %v158, %v154
    %v167 = vpack.c.b16 %v159, %v155
    %vm176 = vcmask 261120
    %v178 = vsel %vm176, %v117, 0
    %180 = vmatpush.bf16.msra.mxu0 0
    %181 = vmatpush.bf16.msra.mxu0 0
    %182 = vmatpush.bf16.msra.mxu0 0
    %183 = vmatpush.bf16.msra.mxu0 0
    %184 = vmatpush.bf16.msra.mxu0 0
    %185 = vmatpush.bf16.msra.mxu0 0
    %186 = vmatpush.bf16.msra.mxu0 %v164
    %187 = vmatpush.bf16.msra.mxu0 %v160
    %188 = vmatmul.bf16.gmra.mxu0 %v178
    %v189 = vpop.f32.mrf.mxu0
    %v190 = vadd.f32 %v128, %v189
    %v191 = vpop.f32.mrf.mxu0
    %192 = vdwg.mxu0
    %193 = vmatpush.bf16.msra.mxu0 0
    %194 = vmatpush.bf16.msra.mxu0 0
    %195 = vmatpush.bf16.msra.mxu0 0
    %196 = vmatpush.bf16.msra.mxu0 0
    %197 = vmatpush.bf16.msra.mxu0 0
    %198 = vmatpush.bf16.msra.mxu0 0
    %199 = vmatpush.bf16.msra.mxu0 %v165
    %200 = vmatpush.bf16.msra.mxu0 %v161
    %201 = vmatmul.bf16.gmra.mxu0 %v178
    %v202 = vpop.f32.mrf.mxu0
    %v203 = vadd.f32 %v129, %v202
    %v204 = vpop.f32.mrf.mxu0
    %205 = vdwg.mxu0
    %206 = vmatpush.bf16.msra.mxu0 0
    %207 = vmatpush.bf16.msra.mxu0 0
    %208 = vmatpush.bf16.msra.mxu0 0
    %209 = vmatpush.bf16.msra.mxu0 0
    %210 = vmatpush.bf16.msra.mxu0 0
    %211 = vmatpush.bf16.msra.mxu0 0
    %212 = vmatpush.bf16.msra.mxu0 %v166
    %213 = vmatpush.bf16.msra.mxu0 %v162
    %214 = vmatmul.bf16.gmra.mxu0 %v178
    %v215 = vpop.f32.mrf.mxu0
    %v216 = vadd.f32 %v130, %v215
    %v217 = vpop.f32.mrf.mxu0
    %218 = vdwg.mxu0
    %219 = vmatpush.bf16.msra.mxu0 0
    %220 = vmatpush.bf16.msra.mxu0 0
    %221 = vmatpush.bf16.msra.mxu0 0
    %222 = vmatpush.bf16.msra.mxu0 0
    %223 = vmatpush.bf16.msra.mxu0 0
    %224 = vmatpush.bf16.msra.mxu0 0
    %225 = vmatpush.bf16.msra.mxu0 %v167
    %226 = vmatpush.bf16.msra.mxu0 %v163
    %227 = vmatmul.bf16.gmra.mxu0 %v178
    %v228 = vpop.f32.mrf.mxu0
    %v229 = vadd.f32 %v131, %v228
    %v230 = vpop.f32.mrf.mxu0
    %231 = vdwg.mxu0
    %v232 = vpack.c.bf16 %v203, %v190
    %v233 = vpack.c.bf16 %v229, %v216
    %v234 = vunpack.c.l.bf16 %v232
    %v235 = vunpack.c.h.bf16 %v232
    %v236 = vunpack.c.l.bf16 %v233
    %v237 = vunpack.c.h.bf16 %v233
    %vm238 = vcmp.ge.f32.partialorder %v234, 0.0
    %vm239 = vcmp.ge.f32.partialorder %v235, 0.0
    %vm240 = vcmp.ge.f32.partialorder %v236, 0.0
    %vm241 = vcmp.ge.f32.partialorder %v237, 0.0
    %v242 = vmul.f32 %v234, 0.010009766
    %v243 = vmul.f32 %v235, 0.010009766
    %v244 = vmul.f32 %v236, 0.010009766
    %v245 = vmul.f32 %v237, 0.010009766
    %v246 = vpack.c.bf16 %v243, %v242
    %v247 = vpack.c.bf16 %v245, %v244
    %vm248 = vmpackc.low %vm239, %vm238
    %vm249 = vmpackc.low %vm241, %vm240
    %v250 = vsel %vm248, %v232, %v246
    %v251 = vsel %vm249, %v233, %v247
    %v252 = vld [vmem:[#allocation8] sm:$0xff]
    %v253 = vld [vmem:[#allocation8 + $0x8] sm:$0xf]
    %v254 = vld [vmem:[#allocation8 + $0xc] sm:$0xff]
    %v255 = vld [vmem:[#allocation8 + $0x14] sm:$0xf]
    %v256 = vld [vmem:[#allocation8 + $0x18] sm:$0xff]
    %v257 = vld [vmem:[#allocation8 + $0x20] sm:$0xf]
    %v258 = vld [vmem:[#allocation8 + $0x24] sm:$0xff]
    %v259 = vld [vmem:[#allocation8 + $0x2c] sm:$0xf]
    %v260 = vld [vmem:[#allocation8 + $0x30] sm:$0xff]
    %v261 = vld [vmem:[#allocation8 + $0x38] sm:$0xf]
    %v262 = vld [vmem:[#allocation8 + $0x3c] sm:$0xff]
    %v263 = vld [vmem:[#allocation8 + $0x44] sm:$0xf]
    %v264 = vld [vmem:[#allocation8 + $0x48] sm:$0xff]
    %v265 = vld [vmem:[#allocation8 + $0x50] sm:$0xf]
    %v266 = vld [vmem:[#allocation8 + $0x54] sm:$0xff]
    %v267 = vld [vmem:[#allocation8 + $0x5c] sm:$0xf]
    %v268 = vld [vmem:[#allocation8 + $0x60] sm:$0xff]
    %v269 = vld [vmem:[#allocation8 + $0x68] sm:$0xf]
    %v270 = vld [vmem:[#allocation8 + $0x6c] sm:$0xff]
    %v271 = vld [vmem:[#allocation8 + $0x74] sm:$0xf]
    %v272 = vld [vmem:[#allocation8 + $0x78] sm:$0xff]
    %v273 = vld [vmem:[#allocation8 + $0x80] sm:$0xf]
    %v274 = vld [vmem:[#allocation8 + $0x84] sm:$0xff]
    %v275 = vld [vmem:[#allocation8 + $0x8c] sm:$0xf]
    %v276 = vld [vmem:[#allocation8 + $0x90] sm:$0xff]
    %v277 = vld [vmem:[#allocation8 + $0x98] sm:$0xf]
    %v278 = vld [vmem:[#allocation8 + $0x9c] sm:$0xff]
    %v279 = vld [vmem:[#allocation8 + $0xa4] sm:$0xf]
    %v280 = vld [vmem:[#allocation8 + $0xa8] sm:$0xff]
    %v281 = vld [vmem:[#allocation8 + $0xb0] sm:$0xf]
    %v282 = vld [vmem:[#allocation8 + $0xb4] sm:$0xff]
    %v283 = vld [vmem:[#allocation8 + $0xbc] sm:$0xf]
    %v284 = vld [vmem:[#allocation8 + $0xc0] sm:$0xff]
    %v285 = vld [vmem:[#allocation8 + $0xc8] sm:$0xf]
    %v286 = vld [vmem:[#allocation8 + $0xcc] sm:$0xff]
    %v287 = vld [vmem:[#allocation8 + $0xd4] sm:$0xf]
    %v288 = vld [vmem:[#allocation8 + $0xd8] sm:$0xff]
    %v289 = vld [vmem:[#allocation8 + $0xe0] sm:$0xf]
    %v290 = vld [vmem:[#allocation8 + $0xe4] sm:$0xff]
    %v291 = vld [vmem:[#allocation8 + $0xec] sm:$0xf]
    %v292 = vld [vmem:[#allocation8 + $0xf0] sm:$0xff]
    %v293 = vld [vmem:[#allocation8 + $0xf8] sm:$0xf]
    %v294 = vld [vmem:[#allocation8 + $0xfc] sm:$0xff]
    %v295 = vld [vmem:[#allocation8 + $0x104] sm:$0xf]
    %v296 = vld [vmem:[#allocation8 + $0x108] sm:$0xff]
    %v297 = vld [vmem:[#allocation8 + $0x110] sm:$0xf]
    %v298 = vld [vmem:[#allocation8 + $0x114] sm:$0xff]
    %v299 = vld [vmem:[#allocation8 + $0x11c] sm:$0xf]
    %v300 = vld [vmem:[#allocation8 + $0x120] sm:$0xff]
    %v301 = vld [vmem:[#allocation8 + $0x128] sm:$0xf]
    %v302 = vld [vmem:[#allocation8 + $0x12c] sm:$0xff]
    %v303 = vld [vmem:[#allocation8 + $0x134] sm:$0xf]
    %v304 = vld [vmem:[#allocation8 + $0x138] sm:$0xff]
    %v305 = vld [vmem:[#allocation8 + $0x140] sm:$0xf]
    %v306 = vld [vmem:[#allocation8 + $0x144] sm:$0xff]
    %v307 = vld [vmem:[#allocation8 + $0x14c] sm:$0xf]
    %v308 = vld [vmem:[#allocation8 + $0x150] sm:$0xff]
    %v309 = vld [vmem:[#allocation8 + $0x158] sm:$0xf]
    %v310 = vld [vmem:[#allocation8 + $0x15c] sm:$0xff]
    %v311 = vld [vmem:[#allocation8 + $0x164] sm:$0xf]
    %v312 = vld [vmem:[#allocation8 + $0x168] sm:$0xff]
    %v313 = vld [vmem:[#allocation8 + $0x170] sm:$0xf]
    %v314 = vld [vmem:[#allocation8 + $0x174] sm:$0xff]
    %v315 = vld [vmem:[#allocation8 + $0x17c] sm:$0xf]
    %v316 = vld [vmem:[#allocation8 + $0x180] sm:$0xff]
    %v317 = vld [vmem:[#allocation8 + $0x188] sm:$0xf]
    %v318 = vld [vmem:[#allocation8 + $0x18c] sm:$0xff]
    %v319 = vld [vmem:[#allocation8 + $0x194] sm:$0xf]
    %v320 = vld [vmem:[#allocation8 + $0x198] sm:$0xff]
    %v321 = vld [vmem:[#allocation8 + $0x1a0] sm:$0xf]
    %v322 = vld [vmem:[#allocation8 + $0x1a4] sm:$0xff]
    %v323 = vld [vmem:[#allocation8 + $0x1ac] sm:$0xf]
    %v324 = vld [vmem:[#allocation8 + $0x1b0] sm:$0xff]
    %v325 = vld [vmem:[#allocation8 + $0x1b8] sm:$0xf]
    %v326 = vld [vmem:[#allocation8 + $0x1bc] sm:$0xff]
    %v327 = vld [vmem:[#allocation8 + $0x1c4] sm:$0xf]
    %v328 = vld [vmem:[#allocation8 + $0x1c8] sm:$0xff]
    %v329 = vld [vmem:[#allocation8 + $0x1d0] sm:$0xf]
    %v330 = vld [vmem:[#allocation8 + $0x1d4] sm:$0xff]
    %v331 = vld [vmem:[#allocation8 + $0x1dc] sm:$0xf]
    %v332 = vld [vmem:[#allocation8 + $0x1e0] sm:$0xff]
    %v333 = vld [vmem:[#allocation8 + $0x1e8] sm:$0xf]
    %v334 = vld [vmem:[#allocation8 + $0x1ec] sm:$0xff]
    %v335 = vld [vmem:[#allocation8 + $0x1f4] sm:$0xf]
    %v336 = vld [vmem:[#allocation8 + $0x1f8] sm:$0xff]
    %v337 = vld [vmem:[#allocation8 + $0x200] sm:$0xf]
    %v338 = vld [vmem:[#allocation8 + $0x204] sm:$0xff]
    %v339 = vld [vmem:[#allocation8 + $0x20c] sm:$0xf]
    %v340 = vld [vmem:[#allocation8 + $0x210] sm:$0xff]
    %v341 = vld [vmem:[#allocation8 + $0x218] sm:$0xf]
    %v342 = vld [vmem:[#allocation8 + $0x21c] sm:$0xff]
    %v343 = vld [vmem:[#allocation8 + $0x224] sm:$0xf]
    %v344 = vld [vmem:[#allocation8 + $0x228] sm:$0xff]
    %v345 = vld [vmem:[#allocation8 + $0x230] sm:$0xf]
    %v346 = vld [vmem:[#allocation8 + $0x234] sm:$0xff]
    %v347 = vld [vmem:[#allocation8 + $0x23c] sm:$0xf]
    %v348 = vld [vmem:[#allocation8 + $0x240] sm:$0xff]
    %v349 = vld [vmem:[#allocation8 + $0x248] sm:$0xf]
    %v350 = vld [vmem:[#allocation8 + $0x24c] sm:$0xff]
    %v351 = vld [vmem:[#allocation8 + $0x254] sm:$0xf]
    %v352 = vld [vmem:[#allocation8 + $0x258] sm:$0xff]
    %v353 = vld [vmem:[#allocation8 + $0x260] sm:$0xf]
    %v354 = vld [vmem:[#allocation8 + $0x264] sm:$0xff]
    %v355 = vld [vmem:[#allocation8 + $0x26c] sm:$0xf]
    %v356 = vld [vmem:[#allocation8 + $0x270] sm:$0xff]
    %v357 = vld [vmem:[#allocation8 + $0x278] sm:$0xf]
    %v358 = vld [vmem:[#allocation8 + $0x27c] sm:$0xff]
    %v359 = vld [vmem:[#allocation8 + $0x284] sm:$0xf]
    %v360 = vld [vmem:[#allocation8 + $0x288] sm:$0xff]
    %v361 = vld [vmem:[#allocation8 + $0x290] sm:$0xf]
    %v362 = vld [vmem:[#allocation8 + $0x294] sm:$0xff]
    %v363 = vld [vmem:[#allocation8 + $0x29c] sm:$0xf]
    %v364 = vld [vmem:[#allocation8 + $0x2a0] sm:$0xff]
    %v365 = vld [vmem:[#allocation8 + $0x2a8] sm:$0xf]
    %v366 = vld [vmem:[#allocation8 + $0x2ac] sm:$0xff]
    %v367 = vld [vmem:[#allocation8 + $0x2b4] sm:$0xf]
    %v368 = vld [vmem:[#allocation8 + $0x2b8] sm:$0xff]
    %v369 = vld [vmem:[#allocation8 + $0x2c0] sm:$0xf]
    %v370 = vld [vmem:[#allocation8 + $0x2c4] sm:$0xff]
    %v371 = vld [vmem:[#allocation8 + $0x2cc] sm:$0xf]
    %v372 = vld [vmem:[#allocation8 + $0x2d0] sm:$0xff]
    %v373 = vld [vmem:[#allocation8 + $0x2d8] sm:$0xf]
    %v374 = vld [vmem:[#allocation8 + $0x2dc] sm:$0xff]
    %v375 = vld [vmem:[#allocation8 + $0x2e4] sm:$0xf]
    %v376 = vld [vmem:[#allocation8 + $0x2e8] sm:$0xff]
    %v377 = vld [vmem:[#allocation8 + $0x2f0] sm:$0xf]
    %v378 = vld [vmem:[#allocation8 + $0x2f4] sm:$0xff]
    %v379 = vld [vmem:[#allocation8 + $0x2fc] sm:$0xf]
    %v380 = vld [vmem:[#allocation10] sm:$0x7]
    %v382 = vperm.slane %v380, 0
    %v383 = vperm.slane %v380, 1
    %v384 = vperm.slane %v380, 2
    %v390 = vunpack.c.l.b16 %v250
    %v391 = vunpack.c.h.b16 %v250
    %v392 = vunpack.c.l.b16 %v251
    %v393 = vunpack.c.h.b16 %v251
    %v394 = vpack.c.b16 %v390, %v390
    %v395 = vpack.c.b16 %v391, %v391
    %v396 = vpack.c.b16 %v392, %v392
    %v397 = vpack.c.b16 %v393, %v393
    %v530 = vunpack.c.l.b16 %v252
    %v531 = vunpack.c.h.b16 %v252
    %v532 = vunpack.c.l.b16 %v253
    %v533 = vunpack.c.l.b16 %v254
    %v534 = vunpack.c.h.b16 %v254
    %v535 = vunpack.c.l.b16 %v255
    %v536 = vunpack.c.l.b16 %v256
    %v537 = vunpack.c.h.b16 %v256
    %v538 = vunpack.c.l.b16 %v257
    %v539 = vunpack.c.l.b16 %v258
    %v540 = vunpack.c.h.b16 %v258
    %v541 = vunpack.c.l.b16 %v259
    %v542 = vunpack.c.l.b16 %v260
    %v543 = vunpack.c.h.b16 %v260
    %v544 = vunpack.c.l.b16 %v261
    %v545 = vunpack.c.l.b16 %v262
    %v546 = vunpack.c.h.b16 %v262
    %v547 = vunpack.c.l.b16 %v263
    %v548 = vunpack.c.l.b16 %v264
    %v549 = vunpack.c.h.b16 %v264
    %v550 = vunpack.c.l.b16 %v265
    %v551 = vunpack.c.l.b16 %v266
    %v552 = vunpack.c.h.b16 %v266
    %v553 = vunpack.c.l.b16 %v267
    %v554 = vunpack.c.l.b16 %v268
    %v555 = vunpack.c.h.b16 %v268
    %v556 = vunpack.c.l.b16 %v269
    %v557 = vunpack.c.l.b16 %v270
    %v558 = vunpack.c.h.b16 %v270
    %v559 = vunpack.c.l.b16 %v271
    %v560 = vunpack.c.l.b16 %v272
    %v561 = vunpack.c.h.b16 %v272
    %v562 = vunpack.c.l.b16 %v273
    %v563 = vunpack.c.l.b16 %v274
    %v564 = vunpack.c.h.b16 %v274
    %v565 = vunpack.c.l.b16 %v275
    %v566 = vunpack.c.l.b16 %v276
    %v567 = vunpack.c.h.b16 %v276
    %v568 = vunpack.c.l.b16 %v277
    %v569 = vunpack.c.l.b16 %v278
    %v570 = vunpack.c.h.b16 %v278
    %v571 = vunpack.c.l.b16 %v279
    %v572 = vunpack.c.l.b16 %v280
    %v573 = vunpack.c.h.b16 %v280
    %v574 = vunpack.c.l.b16 %v281
    %v575 = vunpack.c.l.b16 %v282
    %v576 = vunpack.c.h.b16 %v282
    %v577 = vunpack.c.l.b16 %v283
    %v578 = vunpack.c.l.b16 %v284
    %v579 = vunpack.c.h.b16 %v284
    %v580 = vunpack.c.l.b16 %v285
    %v581 = vunpack.c.l.b16 %v286
    %v582 = vunpack.c.h.b16 %v286
    %v583 = vunpack.c.l.b16 %v287
    %v584 = vunpack.c.l.b16 %v288
    %v585 = vunpack.c.h.b16 %v288
    %v586 = vunpack.c.l.b16 %v289
    %v587 = vunpack.c.l.b16 %v290
    %v588 = vunpack.c.h.b16 %v290
    %v589 = vunpack.c.l.b16 %v291
    %v590 = vunpack.c.l.b16 %v292
    %v591 = vunpack.c.h.b16 %v292
    %v592 = vunpack.c.l.b16 %v293
    %v593 = vunpack.c.l.b16 %v294
    %v594 = vunpack.c.h.b16 %v294
    %v595 = vunpack.c.l.b16 %v295
    %v596 = vunpack.c.l.b16 %v296
    %v597 = vunpack.c.h.b16 %v296
    %v598 = vunpack.c.l.b16 %v297
    %v599 = vunpack.c.l.b16 %v298
    %v600 = vunpack.c.h.b16 %v298
    %v601 = vunpack.c.l.b16 %v299
    %v602 = vunpack.c.l.b16 %v300
    %v603 = vunpack.c.h.b16 %v300
    %v604 = vunpack.c.l.b16 %v301
    %v605 = vunpack.c.l.b16 %v302
    %v606 = vunpack.c.h.b16 %v302
    %v607 = vunpack.c.l.b16 %v303
    %v608 = vunpack.c.l.b16 %v304
    %v609 = vunpack.c.h.b16 %v304
    %v610 = vunpack.c.l.b16 %v305
    %v611 = vunpack.c.l.b16 %v306
    %v612 = vunpack.c.h.b16 %v306
    %v613 = vunpack.c.l.b16 %v307
    %v614 = vunpack.c.l.b16 %v308
    %v615 = vunpack.c.h.b16 %v308
    %v616 = vunpack.c.l.b16 %v309
    %v617 = vunpack.c.l.b16 %v310
    %v618 = vunpack.c.h.b16 %v310
    %v619 = vunpack.c.l.b16 %v311
    %v620 = vunpack.c.l.b16 %v312
    %v621 = vunpack.c.h.b16 %v312
    %v622 = vunpack.c.l.b16 %v313
    %v623 = vunpack.c.l.b16 %v314
    %v624 = vunpack.c.h.b16 %v314
    %v625 = vunpack.c.l.b16 %v315
    %v626 = vunpack.c.l.b16 %v316
    %v627 = vunpack.c.h.b16 %v316
    %v628 = vunpack.c.l.b16 %v317
    %v629 = vunpack.c.l.b16 %v318
    %v630 = vunpack.c.h.b16 %v318
    %v631 = vunpack.c.l.b16 %v319
    %v632 = vunpack.c.l.b16 %v320
    %v633 = vunpack.c.h.b16 %v320
    %v634 = vunpack.c.l.b16 %v321
    %v635 = vunpack.c.l.b16 %v322
    %v636 = vunpack.c.h.b16 %v322
    %v637 = vunpack.c.l.b16 %v323
    %v638 = vunpack.c.l.b16 %v324
    %v639 = vunpack.c.h.b16 %v324
    %v640 = vunpack.c.l.b16 %v325
    %v641 = vunpack.c.l.b16 %v326
    %v642 = vunpack.c.h.b16 %v326
    %v643 = vunpack.c.l.b16 %v327
    %v644 = vunpack.c.l.b16 %v328
    %v645 = vunpack.c.h.b16 %v328
    %v646 = vunpack.c.l.b16 %v329
    %v647 = vunpack.c.l.b16 %v330
    %v648 = vunpack.c.h.b16 %v330
    %v649 = vunpack.c.l.b16 %v331
    %v650 = vunpack.c.l.b16 %v332
    %v651 = vunpack.c.h.b16 %v332
    %v652 = vunpack.c.l.b16 %v333
    %v653 = vunpack.c.l.b16 %v334
    %v654 = vunpack.c.h.b16 %v334
    %v655 = vunpack.c.l.b16 %v335
    %v656 = vunpack.c.l.b16 %v336
    %v657 = vunpack.c.h.b16 %v336
    %v658 = vunpack.c.l.b16 %v337
    %v659 = vunpack.c.l.b16 %v338
    %v660 = vunpack.c.h.b16 %v338
    %v661 = vunpack.c.l.b16 %v339
    %v662 = vunpack.c.l.b16 %v340
    %v663 = vunpack.c.h.b16 %v340
    %v664 = vunpack.c.l.b16 %v341
    %v665 = vunpack.c.l.b16 %v342
    %v666 = vunpack.c.h.b16 %v342
    %v667 = vunpack.c.l.b16 %v343
    %v668 = vunpack.c.l.b16 %v344
    %v669 = vunpack.c.h.b16 %v344
    %v670 = vunpack.c.l.b16 %v345
    %v671 = vunpack.c.l.b16 %v346
    %v672 = vunpack.c.h.b16 %v346
    %v673 = vunpack.c.l.b16 %v347
    %v674 = vunpack.c.l.b16 %v348
    %v675 = vunpack.c.h.b16 %v348
    %v676 = vunpack.c.l.b16 %v349
    %v677 = vunpack.c.l.b16 %v350
    %v678 = vunpack.c.h.b16 %v350
    %v679 = vunpack.c.l.b16 %v351
    %v680 = vunpack.c.l.b16 %v352
    %v681 = vunpack.c.h.b16 %v352
    %v682 = vunpack.c.l.b16 %v353
    %v683 = vunpack.c.l.b16 %v354
    %v684 = vunpack.c.h.b16 %v354
    %v685 = vunpack.c.l.b16 %v355
    %v686 = vunpack.c.l.b16 %v356
    %v687 = vunpack.c.h.b16 %v356
    %v688 = vunpack.c.l.b16 %v357
    %v689 = vunpack.c.l.b16 %v358
    %v690 = vunpack.c.h.b16 %v358
    %v691 = vunpack.c.l.b16 %v359
    %v692 = vunpack.c.l.b16 %v360
    %v693 = vunpack.c.h.b16 %v360
    %v694 = vunpack.c.l.b16 %v361
    %v695 = vunpack.c.l.b16 %v362
    %v696 = vunpack.c.h.b16 %v362
    %v697 = vunpack.c.l.b16 %v363
    %v698 = vunpack.c.l.b16 %v364
    %v699 = vunpack.c.h.b16 %v364
    %v700 = vunpack.c.l.b16 %v365
    %v701 = vunpack.c.l.b16 %v366
    %v702 = vunpack.c.h.b16 %v366
    %v703 = vunpack.c.l.b16 %v367
    %v704 = vunpack.c.l.b16 %v368
    %v705 = vunpack.c.h.b16 %v368
    %v706 = vunpack.c.l.b16 %v369
    %v707 = vunpack.c.l.b16 %v370
    %v708 = vunpack.c.h.b16 %v370
    %v709 = vunpack.c.l.b16 %v371
    %v710 = vunpack.c.l.b16 %v372
    %v711 = vunpack.c.h.b16 %v372
    %v712 = vunpack.c.l.b16 %v373
    %v713 = vunpack.c.l.b16 %v374
    %v714 = vunpack.c.h.b16 %v374
    %v715 = vunpack.c.l.b16 %v375
    %v716 = vunpack.c.l.b16 %v376
    %v717 = vunpack.c.h.b16 %v376
    %v718 = vunpack.c.l.b16 %v377
    %v719 = vunpack.c.l.b16 %v378
    %v720 = vunpack.c.h.b16 %v378
    %v721 = vunpack.c.l.b16 %v379
    %v722 = vpack.c.b16 %v533, %v530
    %v723 = vpack.c.b16 %v534, %v531
    %v724 = vpack.c.b16 %v535, %v532
    %v725 = vpack.c.b16 %v539, %v536
    %v726 = vpack.c.b16 %v540, %v537
    %v727 = vpack.c.b16 %v541, %v538
    %v728 = vpack.c.b16 %v545, %v542
    %v729 = vpack.c.b16 %v546, %v543
    %v730 = vpack.c.b16 %v547, %v544
    %v731 = vpack.c.b16 %v551, %v548
    %v732 = vpack.c.b16 %v552, %v549
    %v733 = vpack.c.b16 %v553, %v550
    %v734 = vpack.c.b16 %v557, %v554
    %v735 = vpack.c.b16 %v558, %v555
    %v736 = vpack.c.b16 %v559, %v556
    %v737 = vpack.c.b16 %v563, %v560
    %v738 = vpack.c.b16 %v564, %v561
    %v739 = vpack.c.b16 %v565, %v562
    %v740 = vpack.c.b16 %v569, %v566
    %v741 = vpack.c.b16 %v570, %v567
    %v742 = vpack.c.b16 %v571, %v568
    %v743 = vpack.c.b16 %v575, %v572
    %v744 = vpack.c.b16 %v576, %v573
    %v745 = vpack.c.b16 %v577, %v574
    %v746 = vpack.c.b16 %v581, %v578
    %v747 = vpack.c.b16 %v582, %v579
    %v748 = vpack.c.b16 %v583, %v580
    %v749 = vpack.c.b16 %v587, %v584
    %v750 = vpack.c.b16 %v588, %v585
    %v751 = vpack.c.b16 %v589, %v586
    %v752 = vpack.c.b16 %v593, %v590
    %v753 = vpack.c.b16 %v594, %v591
    %v754 = vpack.c.b16 %v595, %v592
    %v755 = vpack.c.b16 %v599, %v596
    %v756 = vpack.c.b16 %v600, %v597
    %v757 = vpack.c.b16 %v601, %v598
    %v758 = vpack.c.b16 %v605, %v602
    %v759 = vpack.c.b16 %v606, %v603
    %v760 = vpack.c.b16 %v607, %v604
    %v761 = vpack.c.b16 %v611, %v608
    %v762 = vpack.c.b16 %v612, %v609
    %v763 = vpack.c.b16 %v613, %v610
    %v764 = vpack.c.b16 %v617, %v614
    %v765 = vpack.c.b16 %v618, %v615
    %v766 = vpack.c.b16 %v619, %v616
    %v767 = vpack.c.b16 %v623, %v620
    %v768 = vpack.c.b16 %v624, %v621
    %v769 = vpack.c.b16 %v625, %v622
    %v770 = vpack.c.b16 %v629, %v626
    %v771 = vpack.c.b16 %v630, %v627
    %v772 = vpack.c.b16 %v631, %v628
    %v773 = vpack.c.b16 %v635, %v632
    %v774 = vpack.c.b16 %v636, %v633
    %v775 = vpack.c.b16 %v637, %v634
    %v776 = vpack.c.b16 %v641, %v638
    %v777 = vpack.c.b16 %v642, %v639
    %v778 = vpack.c.b16 %v643, %v640
    %v779 = vpack.c.b16 %v647, %v644
    %v780 = vpack.c.b16 %v648, %v645
    %v781 = vpack.c.b16 %v649, %v646
    %v782 = vpack.c.b16 %v653, %v650
    %v783 = vpack.c.b16 %v654, %v651
    %v784 = vpack.c.b16 %v655, %v652
    %v785 = vpack.c.b16 %v659, %v656
    %v786 = vpack.c.b16 %v660, %v657
    %v787 = vpack.c.b16 %v661, %v658
    %v788 = vpack.c.b16 %v665, %v662
    %v789 = vpack.c.b16 %v666, %v663
    %v790 = vpack.c.b16 %v667, %v664
    %v791 = vpack.c.b16 %v671, %v668
    %v792 = vpack.c.b16 %v672, %v669
    %v793 = vpack.c.b16 %v673, %v670
    %v794 = vpack.c.b16 %v677, %v674
    %v795 = vpack.c.b16 %v678, %v675
    %v796 = vpack.c.b16 %v679, %v676
    %v797 = vpack.c.b16 %v683, %v680
    %v798 = vpack.c.b16 %v684, %v681
    %v799 = vpack.c.b16 %v685, %v682
    %v800 = vpack.c.b16 %v689, %v686
    %v801 = vpack.c.b16 %v690, %v687
    %v802 = vpack.c.b16 %v691, %v688
    %v803 = vpack.c.b16 %v695, %v692
    %v804 = vpack.c.b16 %v696, %v693
    %v805 = vpack.c.b16 %v697, %v694
    %v806 = vpack.c.b16 %v701, %v698
    %v807 = vpack.c.b16 %v702, %v699
    %v808 = vpack.c.b16 %v703, %v700
    %v809 = vpack.c.b16 %v707, %v704
    %v810 = vpack.c.b16 %v708, %v705
    %v811 = vpack.c.b16 %v709, %v706
    %v812 = vpack.c.b16 %v713, %v710
    %v813 = vpack.c.b16 %v714, %v711
    %v814 = vpack.c.b16 %v715, %v712
    %v815 = vpack.c.b16 %v719, %v716
    %v816 = vpack.c.b16 %v720, %v717
    %v817 = vpack.c.b16 %v721, %v718
    %914 = vmatpush.bf16.msra.mxu0 %v743
    %915 = vmatpush.bf16.msra.mxu0 %v740
    %916 = vmatpush.bf16.msra.mxu0 %v737
    %917 = vmatpush.bf16.msra.mxu0 %v734
    %918 = vmatpush.bf16.msra.mxu0 %v731
    %919 = vmatpush.bf16.msra.mxu0 %v728
    %920 = vmatpush.bf16.msra.mxu0 %v725
    %921 = vmatpush.bf16.msra.mxu0 %v722
    %922 = vmatmul.bf16.gmra.mxu0 %v394
    %v923 = vpop.f32.mrf.mxu0
    %v924 = vadd.f32 %v382, %v923
    %v925 = vpop.f32.mrf.mxu0
    %926 = vdwg.mxu0
    %927 = vmatpush.bf16.msra.mxu0 %v767
    %928 = vmatpush.bf16.msra.mxu0 %v764
    %929 = vmatpush.bf16.msra.mxu0 %v761
    %930 = vmatpush.bf16.msra.mxu0 %v758
    %931 = vmatpush.bf16.msra.mxu0 %v755
    %932 = vmatpush.bf16.msra.mxu0 %v752
    %933 = vmatpush.bf16.msra.mxu0 %v749
    %934 = vmatpush.bf16.msra.mxu0 %v746
    %935 = vmatmul.bf16.gmra.mxu0 %v395
    %v936 = vpop.f32.mrf.mxu0
    %v937 = vadd.f32 %v924, %v936
    %v938 = vpop.f32.mrf.mxu0
    %939 = vdwg.mxu0
    %940 = vmatpush.bf16.msra.mxu0 %v791
    %941 = vmatpush.bf16.msra.mxu0 %v788
    %942 = vmatpush.bf16.msra.mxu0 %v785
    %943 = vmatpush.bf16.msra.mxu0 %v782
    %944 = vmatpush.bf16.msra.mxu0 %v779
    %945 = vmatpush.bf16.msra.mxu0 %v776
    %946 = vmatpush.bf16.msra.mxu0 %v773
    %947 = vmatpush.bf16.msra.mxu0 %v770
    %948 = vmatmul.bf16.gmra.mxu0 %v396
    %v949 = vpop.f32.mrf.mxu0
    %v950 = vadd.f32 %v937, %v949
    %v951 = vpop.f32.mrf.mxu0
    %952 = vdwg.mxu0
    %953 = vmatpush.bf16.msra.mxu0 %v815
    %954 = vmatpush.bf16.msra.mxu0 %v812
    %955 = vmatpush.bf16.msra.mxu0 %v809
    %956 = vmatpush.bf16.msra.mxu0 %v806
    %957 = vmatpush.bf16.msra.mxu0 %v803
    %958 = vmatpush.bf16.msra.mxu0 %v800
    %959 = vmatpush.bf16.msra.mxu0 %v797
    %960 = vmatpush.bf16.msra.mxu0 %v794
    %961 = vmatmul.bf16.gmra.mxu0 %v397
    %v962 = vpop.f32.mrf.mxu0
    %v963 = vadd.f32 %v950, %v962
    %v964 = vpop.f32.mrf.mxu0
    %965 = vdwg.mxu0
    %966 = vmatpush.bf16.msra.mxu0 %v744
    %967 = vmatpush.bf16.msra.mxu0 %v741
    %968 = vmatpush.bf16.msra.mxu0 %v738
    %969 = vmatpush.bf16.msra.mxu0 %v735
    %970 = vmatpush.bf16.msra.mxu0 %v732
    %971 = vmatpush.bf16.msra.mxu0 %v729
    %972 = vmatpush.bf16.msra.mxu0 %v726
    %973 = vmatpush.bf16.msra.mxu0 %v723
    %974 = vmatmul.bf16.gmra.mxu0 %v394
    %v975 = vpop.f32.mrf.mxu0
    %v976 = vadd.f32 %v383, %v975
    %v977 = vpop.f32.mrf.mxu0
    %978 = vdwg.mxu0
    %979 = vmatpush.bf16.msra.mxu0 %v768
    %980 = vmatpush.bf16.msra.mxu0 %v765
    %981 = vmatpush.bf16.msra.mxu0 %v762
    %982 = vmatpush.bf16.msra.mxu0 %v759
    %983 = vmatpush.bf16.msra.mxu0 %v756
    %984 = vmatpush.bf16.msra.mxu0 %v753
    %985 = vmatpush.bf16.msra.mxu0 %v750
    %986 = vmatpush.bf16.msra.mxu0 %v747
    %987 = vmatmul.bf16.gmra.mxu0 %v395
    %v988 = vpop.f32.mrf.mxu0
    %v989 = vadd.f32 %v976, %v988
    %v990 = vpop.f32.mrf.mxu0
    %991 = vdwg.mxu0
    %992 = vmatpush.bf16.msra.mxu0 %v792
    %993 = vmatpush.bf16.msra.mxu0 %v789
    %994 = vmatpush.bf16.msra.mxu0 %v786
    %995 = vmatpush.bf16.msra.mxu0 %v783
    %996 = vmatpush.bf16.msra.mxu0 %v780
    %997 = vmatpush.bf16.msra.mxu0 %v777
    %998 = vmatpush.bf16.msra.mxu0 %v774
    %999 = vmatpush.bf16.msra.mxu0 %v771
    %1000 = vmatmul.bf16.gmra.mxu0 %v396
    %v1001 = vpop.f32.mrf.mxu0
    %v1002 = vadd.f32 %v989, %v1001
    %v1003 = vpop.f32.mrf.mxu0
    %1004 = vdwg.mxu0
    %1005 = vmatpush.bf16.msra.mxu0 %v816
    %1006 = vmatpush.bf16.msra.mxu0 %v813
    %1007 = vmatpush.bf16.msra.mxu0 %v810
    %1008 = vmatpush.bf16.msra.mxu0 %v807
    %1009 = vmatpush.bf16.msra.mxu0 %v804
    %1010 = vmatpush.bf16.msra.mxu0 %v801
    %1011 = vmatpush.bf16.msra.mxu0 %v798
    %1012 = vmatpush.bf16.msra.mxu0 %v795
    %1013 = vmatmul.bf16.gmra.mxu0 %v397
    %v1014 = vpop.f32.mrf.mxu0
    %v1015 = vadd.f32 %v1002, %v1014
    %v1016 = vpop.f32.mrf.mxu0
    %1017 = vdwg.mxu0
    %1018 = vmatpush.bf16.msra.mxu0 %v745
    %1019 = vmatpush.bf16.msra.mxu0 %v742
    %1020 = vmatpush.bf16.msra.mxu0 %v739
    %1021 = vmatpush.bf16.msra.mxu0 %v736
    %1022 = vmatpush.bf16.msra.mxu0 %v733
    %1023 = vmatpush.bf16.msra.mxu0 %v730
    %1024 = vmatpush.bf16.msra.mxu0 %v727
    %1025 = vmatpush.bf16.msra.mxu0 %v724
    %1026 = vmatmul.bf16.gmra.mxu0 %v394
    %v1027 = vpop.f32.mrf.mxu0
    %v1028 = vadd.f32 %v384, %v1027
    %v1029 = vpop.f32.mrf.mxu0
    %1030 = vdwg.mxu0
    %1031 = vmatpush.bf16.msra.mxu0 %v769
    %1032 = vmatpush.bf16.msra.mxu0 %v766
    %1033 = vmatpush.bf16.msra.mxu0 %v763
    %1034 = vmatpush.bf16.msra.mxu0 %v760
    %1035 = vmatpush.bf16.msra.mxu0 %v757
    %1036 = vmatpush.bf16.msra.mxu0 %v754
    %1037 = vmatpush.bf16.msra.mxu0 %v751
    %1038 = vmatpush.bf16.msra.mxu0 %v748
    %1039 = vmatmul.bf16.gmra.mxu0 %v395
    %v1040 = vpop.f32.mrf.mxu0
    %v1041 = vadd.f32 %v1028, %v1040
    %v1042 = vpop.f32.mrf.mxu0
    %1043 = vdwg.mxu0
    %1044 = vmatpush.bf16.msra.mxu0 %v793
    %1045 = vmatpush.bf16.msra.mxu0 %v790
    %1046 = vmatpush.bf16.msra.mxu0 %v787
    %1047 = vmatpush.bf16.msra.mxu0 %v784
    %1048 = vmatpush.bf16.msra.mxu0 %v781
    %1049 = vmatpush.bf16.msra.mxu0 %v778
    %1050 = vmatpush.bf16.msra.mxu0 %v775
    %1051 = vmatpush.bf16.msra.mxu0 %v772
    %1052 = vmatmul.bf16.gmra.mxu0 %v396
    %v1053 = vpop.f32.mrf.mxu0
    %v1054 = vadd.f32 %v1041, %v1053
    %v1055 = vpop.f32.mrf.mxu0
    %1056 = vdwg.mxu0
    %1057 = vmatpush.bf16.msra.mxu0 %v817
    %1058 = vmatpush.bf16.msra.mxu0 %v814
    %1059 = vmatpush.bf16.msra.mxu0 %v811
    %1060 = vmatpush.bf16.msra.mxu0 %v808
    %1061 = vmatpush.bf16.msra.mxu0 %v805
    %1062 = vmatpush.bf16.msra.mxu0 %v802
    %1063 = vmatpush.bf16.msra.mxu0 %v799
    %1064 = vmatpush.bf16.msra.mxu0 %v796
    %1065 = vmatmul.bf16.gmra.mxu0 %v397
    %v1066 = vpop.f32.mrf.mxu0
    %v1067 = vadd.f32 %v1054, %v1066
    %v1068 = vpop.f32.mrf.mxu0
    %1069 = vdwg.mxu0
    %v1070 = vpack.c.bf16 %v1015, %v963
    %v1071 = vpack.c.bf16 %v1067, %v1067
    %v1072 = vunpack.c.l.bf16 %v1070
    %v1073 = vunpack.c.h.bf16 %v1070
    %v1074 = vunpack.c.l.bf16 %v1071
    %vm1075 = vcmp.ge.f32.partialorder %v1072, 0.0
    %vm1076 = vcmp.ge.f32.partialorder %v1073, 0.0
    %vm1077 = vcmp.ge.f32.partialorder %v1074, 0.0
    %v1078 = vmul.f32 %v1072, 0.010009766
    %v1079 = vmul.f32 %v1073, 0.010009766
    %v1080 = vmul.f32 %v1074, 0.010009766
    %v1081 = vpack.c.bf16 %v1079, %v1078
    %v1082 = vpack.c.bf16 %v1080, %v1080
    %vm1083 = vmpackc.low %vm1076, %vm1075
    %vm1084 = vmpackc.low %vm1077, %vm1077
    %v1085 = vsel %vm1083, %v1070, %v1081
    %v1086 = vsel %vm1084, %v1071, %v1082
    %v1087 = vld [vmem:[#allocation11] sm:$0xf]
    %v1088 = vld [vmem:[#allocation11 + $0x4] sm:$0xf]
    %v1089 = vld [vmem:[#allocation11 + $0x8] sm:$0xf]
    %v1090 = vld [vmem:[#allocation11 + $0xc] sm:$0xf]
    %v1091 = vld [vmem:[#allocation11 + $0x10] sm:$0xf]
    %v1092 = vld [vmem:[#allocation11 + $0x14] sm:$0xf]
    %v1093 = vld [vmem:[#allocation11 + $0x18] sm:$0xf]
    %v1094 = vld [vmem:[#allocation11 + $0x1c] sm:$0xf]
    %v1095 = vld [vmem:[#allocation11 + $0x20] sm:$0xf]
    %v1096 = vld [vmem:[#allocation11 + $0x24] sm:$0xf]
    %v1097 = vld [vmem:[#allocation11 + $0x28] sm:$0xf]
    %v1098 = vld [vmem:[#allocation11 + $0x2c] sm:$0xf]
    %v1099 = vld [vmem:[#allocation11 + $0x30] sm:$0xf]
    %v1100 = vld [vmem:[#allocation11 + $0x34] sm:$0xf]
    %v1101 = vld [vmem:[#allocation11 + $0x38] sm:$0xf]
    %v1102 = vld [vmem:[#allocation11 + $0x3c] sm:$0xf]
    %v1103 = vld [vmem:[#allocation11 + $0x40] sm:$0xf]
    %v1104 = vld [vmem:[#allocation11 + $0x44] sm:$0xf]
    %v1105 = vld [vmem:[#allocation11 + $0x48] sm:$0xf]
    %v1106 = vld [vmem:[#allocation11 + $0x4c] sm:$0xf]
    %v1107 = vld [vmem:[#allocation11 + $0x50] sm:$0xf]
    %v1108 = vld [vmem:[#allocation11 + $0x54] sm:$0xf]
    %v1109 = vld [vmem:[#allocation11 + $0x58] sm:$0xf]
    %v1110 = vld [vmem:[#allocation11 + $0x5c] sm:$0xf]
    %v1111 = vld [vmem:[#allocation11 + $0x60] sm:$0xf]
    %v1112 = vld [vmem:[#allocation11 + $0x64] sm:$0xf]
    %v1113 = vld [vmem:[#allocation11 + $0x68] sm:$0xf]
    %v1114 = vld [vmem:[#allocation11 + $0x6c] sm:$0xf]
    %v1115 = vld [vmem:[#allocation11 + $0x70] sm:$0xf]
    %v1116 = vld [vmem:[#allocation11 + $0x74] sm:$0xf]
    %v1117 = vld [vmem:[#allocation11 + $0x78] sm:$0xf]
    %v1118 = vld [vmem:[#allocation11 + $0x7c] sm:$0xf]
    %v1119 = vld [vmem:[#allocation11 + $0x80] sm:$0xf]
    %v1120 = vld [vmem:[#allocation11 + $0x84] sm:$0xf]
    %v1121 = vld [vmem:[#allocation11 + $0x88] sm:$0xf]
    %v1122 = vld [vmem:[#allocation11 + $0x8c] sm:$0xf]
    %v1123 = vld [vmem:[#allocation11 + $0x90] sm:$0xf]
    %v1124 = vld [vmem:[#allocation11 + $0x94] sm:$0xf]
    %v1125 = vld [vmem:[#allocation11 + $0x98] sm:$0xf]
    %v1126 = vld [vmem:[#allocation11 + $0x9c] sm:$0xf]
    %v1127 = vld [vmem:[#allocation11 + $0xa0] sm:$0xf]
    %v1128 = vld [vmem:[#allocation11 + $0xa4] sm:$0xf]
    %v1129 = vld [vmem:[#allocation11 + $0xa8] sm:$0xf]
    %v1130 = vld [vmem:[#allocation11 + $0xac] sm:$0xf]
    %v1131 = vld [vmem:[#allocation11 + $0xb0] sm:$0xf]
    %v1132 = vld [vmem:[#allocation11 + $0xb4] sm:$0xf]
    %v1133 = vld [vmem:[#allocation11 + $0xb8] sm:$0xf]
    %v1134 = vld [vmem:[#allocation11 + $0xbc] sm:$0xf]
    %v1135 = vld [vmem:[%s6] sm:$0x1]
    %v1137 = vperm.slane %v1135, 0
    %v1141 = vunpack.c.l.b16 %v1085
    %v1142 = vunpack.c.h.b16 %v1085
    %v1143 = vunpack.c.l.b16 %v1086
    %v1144 = vpack.c.b16 %v1141, %v1141
    %v1145 = vpack.c.b16 %v1142, %v1142
    %v1146 = vpack.c.b16 %v1143, %v1143
    %v1198 = vunpack.c.l.b16 %v1087
    %v1199 = vunpack.c.l.b16 %v1088
    %v1200 = vunpack.c.l.b16 %v1089
    %v1201 = vunpack.c.l.b16 %v1090
    %v1202 = vunpack.c.l.b16 %v1091
    %v1203 = vunpack.c.l.b16 %v1092
    %v1204 = vunpack.c.l.b16 %v1093
    %v1205 = vunpack.c.l.b16 %v1094
    %v1206 = vunpack.c.l.b16 %v1095
    %v1207 = vunpack.c.l.b16 %v1096
    %v1208 = vunpack.c.l.b16 %v1097
    %v1209 = vunpack.c.l.b16 %v1098
    %v1210 = vunpack.c.l.b16 %v1099
    %v1211 = vunpack.c.l.b16 %v1100
    %v1212 = vunpack.c.l.b16 %v1101
    %v1213 = vunpack.c.l.b16 %v1102
    %v1214 = vunpack.c.l.b16 %v1103
    %v1215 = vunpack.c.l.b16 %v1104
    %v1216 = vunpack.c.l.b16 %v1105
    %v1217 = vunpack.c.l.b16 %v1106
    %v1218 = vunpack.c.l.b16 %v1107
    %v1219 = vunpack.c.l.b16 %v1108
    %v1220 = vunpack.c.l.b16 %v1109
    %v1221 = vunpack.c.l.b16 %v1110
    %v1222 = vunpack.c.l.b16 %v1111
    %v1223 = vunpack.c.l.b16 %v1112
    %v1224 = vunpack.c.l.b16 %v1113
    %v1225 = vunpack.c.l.b16 %v1114
    %v1226 = vunpack.c.l.b16 %v1115
    %v1227 = vunpack.c.l.b16 %v1116
    %v1228 = vunpack.c.l.b16 %v1117
    %v1229 = vunpack.c.l.b16 %v1118
    %v1230 = vunpack.c.l.b16 %v1119
    %v1231 = vunpack.c.l.b16 %v1120
    %v1232 = vunpack.c.l.b16 %v1121
    %v1233 = vunpack.c.l.b16 %v1122
    %v1234 = vunpack.c.l.b16 %v1123
    %v1235 = vunpack.c.l.b16 %v1124
    %v1236 = vunpack.c.l.b16 %v1125
    %v1237 = vunpack.c.l.b16 %v1126
    %v1238 = vunpack.c.l.b16 %v1127
    %v1239 = vunpack.c.l.b16 %v1128
    %v1240 = vunpack.c.l.b16 %v1129
    %v1241 = vunpack.c.l.b16 %v1130
    %v1242 = vunpack.c.l.b16 %v1131
    %v1243 = vunpack.c.l.b16 %v1132
    %v1244 = vunpack.c.l.b16 %v1133
    %v1245 = vunpack.c.l.b16 %v1134
    %v1246 = vpack.c.b16 %v1199, %v1198
    %v1247 = vpack.c.b16 %v1201, %v1200
    %v1248 = vpack.c.b16 %v1203, %v1202
    %v1249 = vpack.c.b16 %v1205, %v1204
    %v1250 = vpack.c.b16 %v1207, %v1206
    %v1251 = vpack.c.b16 %v1209, %v1208
    %v1252 = vpack.c.b16 %v1211, %v1210
    %v1253 = vpack.c.b16 %v1213, %v1212
    %v1254 = vpack.c.b16 %v1215, %v1214
    %v1255 = vpack.c.b16 %v1217, %v1216
    %v1256 = vpack.c.b16 %v1219, %v1218
    %v1257 = vpack.c.b16 %v1221, %v1220
    %v1258 = vpack.c.b16 %v1223, %v1222
    %v1259 = vpack.c.b16 %v1225, %v1224
    %v1260 = vpack.c.b16 %v1227, %v1226
    %v1261 = vpack.c.b16 %v1229, %v1228
    %v1262 = vpack.c.b16 %v1231, %v1230
    %v1263 = vpack.c.b16 %v1233, %v1232
    %v1264 = vpack.c.b16 %v1235, %v1234
    %v1265 = vpack.c.b16 %v1237, %v1236
    %v1266 = vpack.c.b16 %v1239, %v1238
    %v1267 = vpack.c.b16 %v1241, %v1240
    %v1268 = vpack.c.b16 %v1243, %v1242
    %v1269 = vpack.c.b16 %v1245, %v1244
    %1294 = vmatpush.bf16.msra.mxu0 %v1253
    %1295 = vmatpush.bf16.msra.mxu0 %v1252
    %1296 = vmatpush.bf16.msra.mxu0 %v1251
    %1297 = vmatpush.bf16.msra.mxu0 %v1250
    %1298 = vmatpush.bf16.msra.mxu0 %v1249
    %1299 = vmatpush.bf16.msra.mxu0 %v1248
    %1300 = vmatpush.bf16.msra.mxu0 %v1247
    %1301 = vmatpush.bf16.msra.mxu0 %v1246
    %1302 = vmatmul.bf16.gmra.mxu0 %v1144
    %v1303 = vpop.f32.mrf.mxu0
    %v1304 = vadd.f32 %v1137, %v1303
    %v1305 = vpop.f32.mrf.mxu0
    %1306 = vdwg.mxu0
    %1307 = vmatpush.bf16.msra.mxu0 %v1261
    %1308 = vmatpush.bf16.msra.mxu0 %v1260
    %1309 = vmatpush.bf16.msra.mxu0 %v1259
    %1310 = vmatpush.bf16.msra.mxu0 %v1258
    %1311 = vmatpush.bf16.msra.mxu0 %v1257
    %1312 = vmatpush.bf16.msra.mxu0 %v1256
    %1313 = vmatpush.bf16.msra.mxu0 %v1255
    %1314 = vmatpush.bf16.msra.mxu0 %v1254
    %1315 = vmatmul.bf16.gmra.mxu0 %v1145
    %v1316 = vpop.f32.mrf.mxu0
    %v1317 = vadd.f32 %v1304, %v1316
    %v1318 = vpop.f32.mrf.mxu0
    %1319 = vdwg.mxu0
    %1320 = vmatpush.bf16.msra.mxu0 %v1269
    %1321 = vmatpush.bf16.msra.mxu0 %v1268
    %1322 = vmatpush.bf16.msra.mxu0 %v1267
    %1323 = vmatpush.bf16.msra.mxu0 %v1266
    %1324 = vmatpush.bf16.msra.mxu0 %v1265
    %1325 = vmatpush.bf16.msra.mxu0 %v1264
    %1326 = vmatpush.bf16.msra.mxu0 %v1263
    %1327 = vmatpush.bf16.msra.mxu0 %v1262
    %1328 = vmatmul.bf16.gmra.mxu0 %v1146
    %v1329 = vpop.f32.mrf.mxu0
    %v1330 = vadd.f32 %v1317, %v1329
    %v1331 = vpop.f32.mrf.mxu0
    %1332 = vdwg.mxu0
    %1333 = vst [vmem:[#allocation13] sm:$0xff] %v1330
    // Predicated region
    $region54: #{encoder_forward.1} parent=1 // pred_check
      _
    $region55: #{encoder_forward.1} parent=1 // pred_check_branch
      %1335 = sbr.rel (0) target = $region57
    $region56: #{encoder_forward.1} parent=1 // pred_region
      %1337 = vsyncadd [#allocation4], 0
      %s1339 = sshll.u32 [#allocation13], 4
      %s1340 = int_to_ptr.vmem [resolvable:$true] %s1339
      %s1341 = sshll.u32 %s7, 4
      %s1342 = int_to_ptr.hbm [resolvable:$true] %s1341
      %1344 = dma.vmem_to_hbm [thread:$0]  %s1340, 128, %s1342, [#allocation4]
    $region57: #{encoder_forward.1} parent=1 // pred_fallthru
      _
    // Predicated region
    $region58: #{encoder_forward.1} parent=1 // pred_check
      _
    $region59: #{encoder_forward.1} parent=1 // pred_check_branch
      %1346 = sbr.rel (0) target = $region61
    $region60: #{encoder_forward.1} parent=1 // pred_region
      %1348 = dma.done [#allocation4], 128
    $region61: #{encoder_forward.1} parent=1 // pred_fallthru
      _
    %1349 = vsyncpa [#allocation3], 1
    %1350 = vsyncpa [#allocation6], 1
    %1351 = vsyncpa [#allocation9], 1
    %1352 = vsyncpa [#allocation12], 1
    %1353 = vsyncpa [#allocation4], 1

</llo_original>
